<compile_context>
chip_gen: v5e
topology: v5e:2x2
jax: 0.10.0
libtpu: 0.0.40
codegen_flags: <defaults>
</compile_context>

<pallas_src>
import functools
import math

import jax
import jax.numpy as jnp
from jax.experimental import pallas as pl
from jax.experimental.pallas import tpu as pltpu


def _round_up(x, m):
    return ((x + m - 1) // m) * m


# ---------------------------------------------------------------------------
# Row-tiled linear kernels (W_v, W_e, W_out).  Optional per-row scale fuses
# edge_mask / no-structure zeroing into the matmul epilogue; out_dtype lets
# h_E be emitted directly in bf16.
# ---------------------------------------------------------------------------
def _linear_kernel(x_ref, w_ref, b_ref, o_ref):
    x = x_ref[...].astype(jnp.bfloat16)
    y = jnp.dot(x, w_ref[...], preferred_element_type=jnp.float32) + b_ref[...]
    o_ref[...] = y.astype(o_ref.dtype)


def _linear_scaled_kernel(x_ref, w_ref, b_ref, s_ref, o_ref):
    x = x_ref[...].astype(jnp.bfloat16)
    y = jnp.dot(x, w_ref[...], preferred_element_type=jnp.float32) + b_ref[...]
    o_ref[...] = (y * s_ref[...]).astype(o_ref.dtype)


def pallas_linear(x2d, w, b, row_scale=None, tile_rows=2048, out_dtype=jnp.float32):
    R, Din = x2d.shape
    Dout = w.shape[1]
    tm = R if R <= tile_rows else tile_rows          # full block when small
    grid = (pl.cdiv(R, tm),)

    in_specs = [
        pl.BlockSpec((tm, Din), lambda i: (i, 0)),
        pl.BlockSpec((Din, Dout), lambda i: (0, 0)),
        pl.BlockSpec((1, Dout), lambda i: (0, 0)),
    ]
    args = [x2d, w, b.reshape(1, Dout)]
    kernel = _linear_kernel
    if row_scale is not None:
        in_specs.append(pl.BlockSpec((tm, 1), lambda i: (i, 0)))
        args.append(row_scale.reshape(R, 1).astype(jnp.float32))
        kernel = _linear_scaled_kernel

    return pl.pallas_call(
        kernel,
        out_shape=jax.ShapeDtypeStruct((R, Dout), out_dtype),
        grid=grid,
        in_specs=in_specs,
        out_specs=pl.BlockSpec((tm, Dout), lambda i: (i, 0)),
        compiler_params=pltpu.CompilerParams(dimension_semantics=("parallel",)),
    )(*args)


# ---------------------------------------------------------------------------
# Fused decoder layer:
#   in-kernel neighbor gather (chunked one-hot MXU matmul, 256-lane fused K|V)
#   + NeighborAttention + residual + LayerNorm + FFN + residual + LayerNorm.
# Grid: (batch, L-tile).  The full per-batch h_V (L, H) block stays resident
# for the gather; queries / residual / output use the (TL, H) tile.
# ---------------------------------------------------------------------------
_GATHER_L_CHUNK = 256   # caps the (TL*K, chunk) one-hot matrix size in VMEM


def _layer_norm(x, gamma, beta, eps=1e-6):   # reference uses eps=1e-06
    mu = jnp.mean(x, axis=-1, keepdims=True)
    var = jnp.mean((x - mu) ** 2, axis=-1, keepdims=True)
    return (x - mu) * jax.lax.rsqrt(var + eps) * gamma + beta


def _head_sum_matrices(H, nh, d):
    # hsel   (H, nh): hsel[i, h] = 1 if feature i belongs to head h
    # hsel_t (nh, H): its transpose (built directly; no in-kernel transpose)
    one = jnp.ones((), jnp.bfloat16)
    zero = jnp.zeros((), jnp.bfloat16)
    ii = jax.lax.broadcasted_iota(jnp.int32, (H, nh), 0)
    hh = jax.lax.broadcasted_iota(jnp.int32, (H, nh), 1)
    hsel = jnp.where((ii >= hh * d) & (ii < (hh + 1) * d), one, zero)
    iit = jax.lax.broadcasted_iota(jnp.int32, (nh, H), 1)
    hht = jax.lax.broadcasted_iota(jnp.int32, (nh, H), 0)
    hsel_t = jnp.where((iit >= hht * d) & (iit < (hht + 1) * d), one, zero)
    return hsel, hsel_t


def _transformer_layer_kernel(
    hv_ref, he_ref, conn_ref,
    wq_ref, wkve_ref, wkvv_ref, wo_ref,
    g0_ref, b0_ref,
    win_ref, bin_ref, wffo_ref, bffo_ref,
    g1_ref, b1_ref,
    o_ref,
    *, num_heads,
):
    f32, bf16 = jnp.float32, jnp.bfloat16
    L, H = hv_ref.shape[1], hv_ref.shape[2]
    TL, K = conn_ref.shape[1], conn_ref.shape[2]
    nh = num_heads
    d = H // nh
    inv_sqrt_d = 1.0 / math.sqrt(d)

    lt = pl.program_id(1)
    row0 = pl.multiple_of(lt * TL, TL)

    hv = hv_ref[0]                                   # (L, H) f32, full sequence
    hv_q = hv_ref[0, pl.ds(row0, TL), :]             # (TL, H) query rows
    he = he_ref[0].reshape(TL * K, H)                # (TL*K, H) bf16 edge half
    conn = conn_ref[0]                               # (TL, K) neighbor indices

    # --- projections: K|V pairs fused into 256-lane matmuls (2x256 MXU) ----
    q = jnp.dot(hv_q.astype(bf16), wq_ref[...], preferred_element_type=f32)
    kve = jnp.dot(he, wkve_ref[...], preferred_element_type=f32)          # (TL*K, 2H)
    nkv = jnp.dot(hv.astype(bf16), wkvv_ref[...], preferred_element_type=f32)  # (L, 2H)
    nkv_bf = nkv.astype(bf16)

    # In-kernel neighbor gather of projected K|V node features as a chunked
    # one-hot MXU matmul (replaces the HBM-level gather_nodes + cat of the
    # reference).  The one-hot is built directly in bf16; chunking over L
    # keeps its VMEM footprint fixed at (TL*K, _GATHER_L_CHUNK).
    # TODO(synk): for very long L on v5e, swap this for a DMA/dynamic-gather
    # to remove the O(L)-scaling MXU work.
    one = jnp.ones((), bf16)
    zero = jnp.zeros((), bf16)
    gath = jnp.zeros((TL * K, 2 * H), f32)
    for c0 in range(0, L, _GATHER_L_CHUNK):
        lc = min(_GATHER_L_CHUNK, L - c0)
        lane = jax.lax.broadcasted_iota(jnp.int32, (TL, K, lc), 2) + c0
        oh = jnp.where(conn[:, :, None] == lane, one, zero).reshape(TL * K, lc)
        gath = gath + jnp.dot(oh, nkv_bf[c0:c0 + lc, :], preferred_element_type=f32)

    kvp = kve + gath                                  # (TL*K, 2H)
    kp = kvp[:, :H]
    vp = kvp[:, H:]

    # --- attention scores for all heads at once (lane-dense, bf16 head-sum) -
    hsel, hsel_t = _head_sum_matrices(H, nh, d)
    prod = (q[:, None, :] * kp.reshape(TL, K, H)).reshape(TL * K, H)
    logits = jnp.dot(prod.astype(bf16), hsel, preferred_element_type=f32) * inv_sqrt_d
    logits = logits.reshape(TL, K, nh)

    # NOTE: reference forward passes mask_attend=None -> unmasked softmax.
    m = jnp.max(logits, axis=1, keepdims=True)
    e = jnp.exp(logits - m)
    denom = jnp.sum(e, axis=1, keepdims=True)
    attn = e * pl.reciprocal(denom, approx=True)      # (TL, K, nh)

    # Broadcast attention weights back over each head's d lanes, contract K.
    aexp = jnp.dot(attn.reshape(TL * K, nh).astype(bf16), hsel_t,
                   preferred_element_type=f32)        # (TL*K, H)
    upd = jnp.sum((aexp * vp).reshape(TL, K, H), axis=1)     # (TL, H)
    dh = jnp.dot(upd.astype(bf16), wo_ref[...], preferred_element_type=f32)

    # --- residual + norm + FFN + residual + norm (f32; dropout=identity) ---
    h1 = _layer_norm(hv_q + dh, g0_ref[...], b0_ref[...])
    ffh = jnp.maximum(
        jnp.dot(h1.astype(bf16), win_ref[...], preferred_element_type=f32)
        + bin_ref[...],
        0.0,
    )
    ff = (jnp.dot(ffh.astype(bf16), wffo_ref[...], preferred_element_type=f32)
          + bffo_ref[...])
    o_ref[0] = _layer_norm(h1 + ff, g1_ref[...], b1_ref[...])


def transformer_layer(h_V, h_E, connections, lp, num_heads):
    N, L, H = h_V.shape
    K = h_E.shape[2]
    # L was pre-padded by the caller: either L <= 128 (multiple of 8) or a
    # multiple of 128.  Drop to 64-row tiles when K is large so the in-kernel
    # (TL*K, 2H) temporaries stay bounded on v7x's 64 MiB VMEM.
    if L <= 128:
        tile_l = L
    else:
        tile_l = 64 if K >= 24 else 128
    n_lt = L // tile_l

    kernel = functools.partial(_transformer_layer_kernel, num_heads=num_heads)

    def const(shape):
        return pl.BlockSpec(shape, lambda b, t: (0, 0))

    in_specs = [
        pl.BlockSpec((1, L, H), lambda b, t: (b, 0, 0)),             # full h_V
        pl.BlockSpec((1, tile_l, K, H), lambda b, t: (b, t, 0, 0)),  # h_E tile (bf16)
        pl.BlockSpec((1, tile_l, K), lambda b, t: (b, t, 0)),        # conn tile
        const((H, H)),                        # wq
        const((H, 2 * H)), const((H, 2 * H)),  # [wk|wv] edge half, node half
        const((H, H)),                        # wo
        const((1, H)), const((1, H)),         # norm0
        const((H, 4 * H)), const((1, 4 * H)),
        const((4 * H, H)), const((1, H)),
        const((1, H)), const((1, H)),         # norm1
    ]
    args = [
        h_V, h_E, connections,
        lp["wq"], lp["wkv_e"], lp["wkv_v"], lp["wo"],
        lp["g0"].reshape(1, H), lp["b0"].reshape(1, H),
        lp["win"], lp["bin"].reshape(1, 4 * H),
        lp["wffo"], lp["bffo"].reshape(1, H),
        lp["g1"].reshape(1, H), lp["b1"].reshape(1, H),
    ]
    return pl.pallas_call(
        kernel,
        out_shape=jax.ShapeDtypeStruct((N, L, H), jnp.float32),
        grid=(N, n_lt),
        in_specs=in_specs,
        out_specs=pl.BlockSpec((1, tile_l, H), lambda b, t: (b, t, 0)),
        compiler_params=pltpu.CompilerParams(
            dimension_semantics=("parallel", "parallel"),
            vmem_limit_bytes=48 * 1024 * 1024,
        ),
    )(*args)


# ---------------------------------------------------------------------------
# Full forward pass
# ---------------------------------------------------------------------------
def bidirectional_struct2seq_decoder(
    params, nodes, edges, connections, src, edge_mask, *, num_heads=4, decoder=True
):
    N, L, _ = nodes.shape
    K = connections.shape[2]
    H = params["W_v_w"].shape[1]

    # no_structure branch of the reference -> multiplicative zeroing factor
    no_struct = jnp.logical_and(jnp.all(nodes == 0), jnp.all(edges == 0))
    struct_scale = jnp.where(no_struct, 0.0, 1.0).astype(jnp.float32)

    # sequence-embedding gather + feature concat kept as cheap XLA glue
    h_S = params["W_s"][src]                                    # (N, L, num_letters)
    nodes_cat = jnp.concatenate([nodes, h_S], axis=-1)

    # h_V = W_v([nodes, h_S]) * struct_scale      (scale fused into the kernel)
    v_scale = jnp.broadcast_to(struct_scale, (N * L,))
    h_V = pallas_linear(
        nodes_cat.reshape(N * L, -1), params["W_v_w"], params["W_v_b"],
        row_scale=v_scale,
    ).reshape(N, L, H)

    # h_E = W_e(edges) * edge_mask * struct_scale (fused); emitted in bf16 —
    # it is only ever consumed as the bf16 MXU operand inside the layers, and
    # its per-layer HBM streaming dominates the network's memory traffic.
    e_scale = edge_mask.reshape(N * L * K) * struct_scale
    h_E = pallas_linear(
        edges.reshape(N * L * K, -1), params["W_e_w"], params["W_e_b"],
        row_scale=e_scale, out_dtype=jnp.bfloat16,
    ).reshape(N, L, K, H)

    # Pad L so the layer kernel always gets aligned query tiles (padded rows
    # are never referenced by valid rows' connections; they are sliced off).
    L_pad = _round_up(L, 8) if L <= 128 else _round_up(L, 128)
    if L_pad != L:
        pad = L_pad - L
        h_V = jnp.pad(h_V, ((0, 0), (0, pad), (0, 0)))
        h_E = jnp.pad(h_E, ((0, 0), (0, pad), (0, 0), (0, 0)))
        connections = jnp.pad(connections, ((0, 0), (0, pad), (0, 0)))

    # decoder layers: neighbor gather + concat + attention + FFN all fused,
    # so h_EV (N, L, K, 2H) is never written to HBM.
    for lp in params["layers"]:
        h_V = transformer_layer(h_V, h_E, connections, lp, num_heads)

    h_V = h_V[:, :L]

    if decoder:
        num_letters = params["W_out_w"].shape[1]
        # lane-pad the tiny output dim to 128 for unmasked stores, slice after
        dout_pad = _round_up(num_letters, 128)
        w_out = jnp.pad(params["W_out_w"], ((0, 0), (0, dout_pad - num_letters)))
        b_out = jnp.pad(params["W_out_b"], (0, dout_pad - num_letters))
        logits = pallas_linear(h_V.reshape(N * L, H), w_out, b_out)
        return logits[:, :num_letters].reshape(N, L, num_letters)
    return h_V


# ---------------------------------------------------------------------------
# Deterministic parameter init (xavier-uniform for 2D, zeros/ones otherwise).
# MXU matmul weights are stored in bf16; biases / LayerNorm params in f32.
# wkv_e / wkv_v are the h_E half and gathered-h_V half of the column-wise
# concatenation [W_K.weight.T | W_V.weight.T]  (shape (H, 2H) each).
# ---------------------------------------------------------------------------
def init_params(key, num_letters, node_features, edge_features, hidden_dim, num_layers):
    keys = iter(jax.random.split(key, 256))

    def xavier(shape, dtype=jnp.bfloat16):
        a = math.sqrt(6.0 / (shape[0] + shape[1]))
        return jax.random.uniform(next(keys), shape, jnp.float32, -a, a).astype(dtype)

    H = hidden_dim
    params = {
        "W_s": xavier((num_letters, num_letters), jnp.float32),  # embedding (gathered)
        "W_v_w": xavier((node_features + num_letters, H)),
        "W_v_b": jnp.zeros((H,), jnp.float32),
        "W_e_w": xavier((edge_features, H)),
        "W_e_b": jnp.zeros((H,), jnp.float32),
        "W_out_w": xavier((H, num_letters)),
        "W_out_b": jnp.zeros((num_letters,), jnp.float32),
        "layers": [],
    }
    for _ in range(num_layers):
        wk = xavier((2 * H, H), jnp.float32)   # torch W_K.weight.T
        wv = xavier((2 * H, H), jnp.float32)   # torch W_V.weight.T
        params["layers"].append({
            "wq": xavier((H, H)),
            "wkv_e": jnp.concatenate([wk[:H], wv[:H]], axis=1).astype(jnp.bfloat16),
            "wkv_v": jnp.concatenate([wk[H:], wv[H:]], axis=1).astype(jnp.bfloat16),
            "wo": xavier((H, H)),
            "g0": jnp.ones((H,), jnp.float32),
            "b0": jnp.zeros((H,), jnp.float32),
            "win": xavier((H, 4 * H)),
            "bin": jnp.zeros((4 * H,), jnp.float32),
            "wffo": xavier((4 * H, H)),
            "bffo": jnp.zeros((H,), jnp.float32),
            "g1": jnp.ones((H,), jnp.float32),
            "b1": jnp.zeros((H,), jnp.float32),
        })
    return params


if __name__ == "__main__":
    key = jax.random.PRNGKey(0)
    N, L, K = 2, 8, 4
    num_letters, node_feat, edge_feat, H = 20, 10, 6, 32
    num_layers, num_heads = 3, 4

    k1, k2, k3, k4, k5, kp = jax.random.split(key, 6)
    nodes = jax.random.normal(k1, (N, L, node_feat), jnp.float32)
    edges = jax.random.normal(k2, (N, L, K, edge_feat), jnp.float32)
    connections = jax.random.randint(k3, (N, L, K), 0, L)
    src = jax.random.randint(k4, (N, L), 0, num_letters)
    edge_mask = (jax.random.uniform(k5, (N, L, K, 1)) > 0.2).astype(jnp.float32)

    params = init_params(kp, num_letters, node_feat, edge_feat, H, num_layers)

    logits = bidirectional_struct2seq_decoder(
        params, nodes, edges, connections, src, edge_mask, num_heads=num_heads
    )
    jax.block_until_ready(logits)
    assert logits.shape == (N, L, num_letters)
    print("KERNEL_OK")
</pallas_src>

<mosaic_0001>
module attributes {stable_mosaic.version = 11 : i64} {
  func.func @_linear_scaled_kernel(%arg0: i32, %arg1: memref<16x30xf32, #tpu.memory_space<vmem>>, %arg2: memref<30x32xbf16, #tpu.memory_space<vmem>>, %arg3: memref<1x32xf32, #tpu.memory_space<vmem>>, %arg4: memref<16x1xf32, #tpu.memory_space<vmem>>, %arg5: memref<16x32xf32, #tpu.memory_space<vmem>>) attributes {dimension_semantics = [#tpu.dimension_semantics<parallel>], iteration_bounds = array<i64: 1>, scalar_prefetch = 0 : i64, scratch_operands = 0 : i64, tpu.core_type = #tpu.core_type<tc>, window_params = [{transform_indices = @transform_0, window_bounds = array<i64: 16, 30>}, {pipeline_mode = #tpu.pipeline_mode<synchronous>, transform_indices = @transform_1, window_bounds = array<i64: 30, 32>}, {pipeline_mode = #tpu.pipeline_mode<synchronous>, transform_indices = @transform_2, window_bounds = array<i64: 1, 32>}, {transform_indices = @transform_3, window_bounds = array<i64: 16, 1>}, {transform_indices = @transform_4, window_bounds = array<i64: 16, 32>}]} {
    %c0 = arith.constant 0 : index
    %c0_0 = arith.constant 0 : index
    %0 = vector.load %arg1[%c0, %c0_0] : memref<16x30xf32, #tpu.memory_space<vmem>>, vector<16x30xf32>
    %1 = arith.truncf %0 : vector<16x30xf32> to vector<16x30xbf16>
    %c0_1 = arith.constant 0 : index
    %c0_2 = arith.constant 0 : index
    %2 = vector.load %arg2[%c0_1, %c0_2] : memref<30x32xbf16, #tpu.memory_space<vmem>>, vector<30x32xbf16>
    %cst = arith.constant dense<0.000000e+00> : vector<16x32xf32>
    %3 = tpu.matmul %1, %2, %cst {dimension_numbers = #tpu.dot_dimension_numbers<[1], [0], [0], [1], [0, 0, 1, 1], [], []>} : vector<16x30xbf16>, vector<30x32xbf16>, vector<16x32xf32> -> vector<16x32xf32>
    %c0_3 = arith.constant 0 : index
    %c0_4 = arith.constant 0 : index
    %4 = vector.load %arg3[%c0_3, %c0_4] : memref<1x32xf32, #tpu.memory_space<vmem>>, vector<1x32xf32>
    %5 = vector.broadcast %4 : vector<1x32xf32> to vector<16x32xf32>
    %6 = arith.addf %3, %5 : vector<16x32xf32>
    %c0_5 = arith.constant 0 : index
    %c0_6 = arith.constant 0 : index
    %7 = vector.load %arg4[%c0_5, %c0_6] : memref<16x1xf32, #tpu.memory_space<vmem>>, vector<16x1xf32>
    %8 = vector.broadcast %7 : vector<16x1xf32> to vector<16x32xf32>
    %9 = arith.mulf %6, %8 : vector<16x32xf32>
    %c0_7 = arith.constant 0 : index
    %c0_8 = arith.constant 0 : index
    %10 = vector.load %arg5[%c0_7, %c0_8] : memref<16x32xf32, #tpu.memory_space<vmem>>, vector<16x32xf32>
    tpu.vector_store %arg5[%c0_7, %c0_8], %9 {strides = array<i32>} : memref<16x32xf32, #tpu.memory_space<vmem>>, vector<16x32xf32>,
    return
  }
  func.func @transform_0(%arg0: i32) -> (i32, i32) {
    %c0_i32 = arith.constant 0 : i32
    %c0_i32_0 = arith.constant 0 : i32
    return %arg0, %c0_i32 : i32, i32
  }
  func.func @transform_1(%arg0: i32) -> (i32, i32) {
    %c0_i32 = arith.constant 0 : i32
    %c0_i32_0 = arith.constant 0 : i32
    %c0_i32_1 = arith.constant 0 : i32
    return %c0_i32, %c0_i32_0 : i32, i32
  }
  func.func @transform_2(%arg0: i32) -> (i32, i32) {
    %c0_i32 = arith.constant 0 : i32
    %c0_i32_0 = arith.constant 0 : i32
    %c0_i32_1 = arith.constant 0 : i32
    return %c0_i32, %c0_i32_0 : i32, i32
  }
  func.func @transform_3(%arg0: i32) -> (i32, i32) {
    %c0_i32 = arith.constant 0 : i32
    %c0_i32_0 = arith.constant 0 : i32
    return %arg0, %c0_i32 : i32, i32
  }
  func.func @transform_4(%arg0: i32) -> (i32, i32) {
    %c0_i32 = arith.constant 0 : i32
    %c0_i32_0 = arith.constant 0 : i32
    return %arg0, %c0_i32 : i32, i32
  }
}

</mosaic_0001>

<llo_original>
// kernel: tpu_custom_call.1
$region0: #{tpu_custom_call.1}
  #allocation0 [shape = 'u32[]', space=smem, size = 0x4, offset = 0x4, fixed_abs, tag = 'smem constant byte address 0x4 - core index']
  #allocation1 [shape = 'u32[72,128]{1,0:T(1,128)}', space=vmem, size = 0x9000, scoped, tag = 'internal scratch']
  %s0 = inlined_call_operand.vmem [shape: f32[16,30], index: 0, kind: input, shape index: {}]
  %s1 = inlined_call_operand.hbm [shape: bf16[30,32], index: 1, kind: input, shape index: {}]
  %s2 = inlined_call_operand.vmem [shape: f32[1,32], index: 2, kind: input, shape index: {}]
  %s3 = inlined_call_operand.vmem [shape: f32[16,1], index: 3, kind: input, shape index: {}]
  %s4 = inlined_call_operand.hbm [shape: f32[16,32], index: 4, kind: output, shape index: {}]
  %s5 = sld [smem:[#allocation0]]
  $region30: #{tpu_custom_call.1} parent=0
    _
  %s7 = ssub.s32 1, %s5
  %s8 = scalar_select 0, %s7, %s5
  $region1: #{tpu_custom_call.1} parent=0
    #allocation2 [shape = 'u8[8192]{0}', space=vmem, size = 0x2000, scoped, tag = 'input window, operand 1, single buffered']
    #allocation3 [shape = 's32[1]{0}', space=sflag, size = 0x4, scoped, tag = 'scoped memory for tpu_custom_call.1']
    #allocation4 [shape = 's32[1]{0}', space=sflag, size = 0x4, scoped, tag = 'scoped memory for tpu_custom_call.1']
    #allocation5 [shape = 'u8[8192]{0}', space=vmem, size = 0x2000, scoped, tag = 'output window, operand 0, single buffered']
    %9 = vsyncpa [#allocation3], 0
    %10 = vsyncpa [#allocation4], 0
    // Predicated region
    $region2: #{tpu_custom_call.1} parent=1 // pred_check
      _
    $region3: #{tpu_custom_call.1} parent=1 // pred_check_branch
      %12 = sbr.rel (0) target = $region5
    $region4: #{tpu_custom_call.1} parent=1 // pred_region
      _
    $region5: #{tpu_custom_call.1} parent=1 // pred_fallthru
      _
    // Predicated region
    $region6: #{tpu_custom_call.1} parent=1 // pred_check
      _
    $region7: #{tpu_custom_call.1} parent=1 // pred_check_branch
      %14 = sbr.rel (0) target = $region9
    $region8: #{tpu_custom_call.1} parent=1 // pred_region
      %16 = vsyncadd [#allocation3], 0
      %s17 = sshll.u32 %s1, 4
      %s18 = int_to_ptr.hbm [resolvable:$true] %s17
      %s19 = sshll.u32 [#allocation2], 4
      %s20 = int_to_ptr.vmem [resolvable:$true] %s19
      %25 = dma.hbm_to_vmem [thread:$0]  %s18, 256, %s20, [#allocation3], 64, 64, 4
    $region9: #{tpu_custom_call.1} parent=1 // pred_fallthru
      _
    // Predicated region
    $region10: #{tpu_custom_call.1} parent=1 // pred_check
      _
    $region11: #{tpu_custom_call.1} parent=1 // pred_check_branch
      %27 = sbr.rel (0) target = $region13
    $region12: #{tpu_custom_call.1} parent=1 // pred_region
      _
    $region13: #{tpu_custom_call.1} parent=1 // pred_fallthru
      _
    // Predicated region
    $region14: #{tpu_custom_call.1} parent=1 // pred_check
      _
    $region15: #{tpu_custom_call.1} parent=1 // pred_check_branch
      %29 = sbr.rel (0) target = $region17
    $region16: #{tpu_custom_call.1} parent=1 // pred_region
      _
    $region17: #{tpu_custom_call.1} parent=1 // pred_fallthru
      _
    // Predicated region
    $region18: #{tpu_custom_call.1} parent=1 // pred_check
      _
    $region19: #{tpu_custom_call.1} parent=1 // pred_check_branch
      %31 = sbr.rel (0) target = $region21
    $region20: #{tpu_custom_call.1} parent=1 // pred_region
      %33 = dma.done [#allocation3], 256
    $region21: #{tpu_custom_call.1} parent=1 // pred_fallthru
      _
    %v35 = vld [vmem:[%s0] sm:$0xff]
    %v36 = vld [vmem:[%s0 + $0x8] sm:$0xff]
    %v37 = vpack.c.bf16 %v36, %v35
    %v38 = vld [vmem:[#allocation2] sm:$0xf]
    %v39 = vld [vmem:[#allocation2 + $0x4] sm:$0xf]
    %v40 = vld [vmem:[#allocation2 + $0x8] sm:$0xf]
    %v41 = vld [vmem:[#allocation2 + $0xc] sm:$0x7]
    %v42 = vld [vmem:[%s2] sm:$0x1]
    %v44 = vperm.slane %v42, 0
    %v50 = vunpack.c.l.b16 %v38
    %v51 = vunpack.c.l.b16 %v39
    %v52 = vunpack.c.l.b16 %v40
    %v53 = vunpack.c.l.b16 %v41
    %v54 = vpack.c.b16 %v51, %v50
    %v55 = vpack.c.b16 %v53, %v52
    %vm57 = vcmask 244736
    %v59 = vsel %vm57, %v37, 0
    %vm61 = vcmask 1046528
    %v63 = vsel %vm61, %v55, 0
    %65 = vmatpush.bf16.msra.mxu0 0
    %66 = vmatpush.bf16.msra.mxu0 0
    %67 = vmatpush.bf16.msra.mxu0 0
    %68 = vmatpush.bf16.msra.mxu0 0
    %69 = vmatpush.bf16.msra.mxu0 0
    %70 = vmatpush.bf16.msra.mxu0 0
    %71 = vmatpush.bf16.msra.mxu0 %v63
    %72 = vmatpush.bf16.msra.mxu0 %v54
    %73 = vmatmul.bf16.gmra.mxu0 %v59
    %v74 = vpop.f32.mrf.mxu0
    %v75 = vadd.f32 %v44, %v74
    %v76 = vpop.f32.mrf.mxu0
    %v77 = vadd.f32 %v44, %v76
    %78 = vdwg.mxu0
    %v79 = vld [vmem:[%s3] sm:$0xff]
    %v80 = vld [vmem:[%s3 + $0x8] sm:$0xff]
    %82 = vset.pattern.permute.xlu0 0
    %83 = vperm.xlu0 %82, %v79
    %v84 = vpop.permute.xlu0 %83
    %87 = vset.pattern.permute.xlu0 0
    %88 = vperm.xlu0 %87, %v80
    %v89 = vpop.permute.xlu0 %88
    %v91 = vmul.f32 %v75, %v84
    %v92 = vmul.f32 %v77, %v89
    %vm93 = vcmask 261120
    %94 = vst.msk [vmem:[#allocation5] sm:$0xff] %vm93, %v91
    %95 = vst.msk [vmem:[#allocation5 + $0x8] sm:$0xff] %vm93, %v92
    // Predicated region
    $region22: #{tpu_custom_call.1} parent=1 // pred_check
      _
    $region23: #{tpu_custom_call.1} parent=1 // pred_check_branch
      %97 = sbr.rel (0) target = $region25
    $region24: #{tpu_custom_call.1} parent=1 // pred_region
      %99 = vsyncadd [#allocation4], 0
      %s100 = sshll.u32 [#allocation5], 4
      %s101 = int_to_ptr.vmem [resolvable:$true] %s100
      %s102 = sshll.u32 %s4, 4
      %s103 = int_to_ptr.hbm [resolvable:$true] %s102
      %108 = dma.vmem_to_hbm [thread:$0]  %s101, 256, %s103, [#allocation4], 128, 128, 8
    $region25: #{tpu_custom_call.1} parent=1 // pred_fallthru
      _
    // Predicated region
    $region26: #{tpu_custom_call.1} parent=1 // pred_check
      _
    $region27: #{tpu_custom_call.1} parent=1 // pred_check_branch
      %110 = sbr.rel (0) target = $region29
    $region28: #{tpu_custom_call.1} parent=1 // pred_region
      %112 = dma.done [#allocation4], 256
    $region29: #{tpu_custom_call.1} parent=1 // pred_fallthru
      _
    %113 = vsyncpa [#allocation3], 1
    %114 = vsyncpa [#allocation4], 1

</llo_original>
